<compile_context>
chip_gen: v5e
topology: v5e:2x2
jax: 0.10.0
libtpu: 0.0.40
codegen_flags: <defaults>
</compile_context>

<pallas_src>
import functools

import jax
import jax.numpy as jnp
from jax.experimental import pallas as pl
from jax.experimental.pallas import tpu as pltpu


def _bases_drop_kernel(x_ref, bits_ref, o_ref, *, threshold, scale):
    # x_ref: (M, TL, HW), bits_ref: (TL, HW), o_ref: (M, TL, HW)
    bits = bits_ref[...]
    keep = bits < jnp.uint32(threshold)
    mask = jnp.where(
        keep,
        jnp.asarray(scale, dtype=o_ref.dtype),
        jnp.asarray(0.0, dtype=o_ref.dtype),
    )
    # Broadcast the (TL, HW) mask over the M (bases) axis.
    o_ref[...] = x_ref[...] * mask[None, :, :]


def _choose_tl(L, M, HW, itemsize, budget_bytes=2 * 1024 * 1024):
    """Pick an L-tile so the x block is ~budget_bytes, respecting (8,128) rules."""
    row_bytes = max(1, M * HW * itemsize)
    tl = max(1, budget_bytes // row_bytes)
    if tl >= L:
        return L            # full extent: always legal
    tl = (tl // 8) * 8       # must be a multiple of 8 if not full extent
    if tl < 8:
        tl = 8
    if tl >= L:
        return L
    return tl


def bases_drop(x, p, key, training=True):
    """Pallas implementation of Bases_Drop.forward.

    x: (N, M, L, H, W) array; key: jax PRNG key for the dropout mask.
    Returns an array of the same shape/dtype.
    """
    if not training or p == 0.0:
        return x

    N, M, L, H, W = x.shape
    HW = H * W
    keep_prob = 1.0 - float(p)
    scale = 1.0 / keep_prob
    # keep iff bits < threshold, P(keep) = threshold / 2^32 ≈ 1 - p
    threshold = min(int(round(keep_prob * 2.0**32)), 2**32 - 1)

    # Free, contiguous reshape to a lane-dense layout.
    x4 = x.reshape(N, M, L, HW)
    bits = jax.random.bits(key, (N, L, HW), dtype=jnp.uint32)

    TL = _choose_tl(L, M, HW, x.dtype.itemsize)
    grid = (N, pl.cdiv(L, TL))

    kernel = functools.partial(
        _bases_drop_kernel, threshold=threshold, scale=scale
    )

    out = pl.pallas_call(
        kernel,
        out_shape=jax.ShapeDtypeStruct((N, M, L, HW), x.dtype),
        grid=grid,
        in_specs=[
            pl.BlockSpec((None, M, TL, HW), lambda n, lb: (n, 0, lb, 0)),
            pl.BlockSpec((None, TL, HW), lambda n, lb: (n, lb, 0)),
        ],
        out_specs=pl.BlockSpec((None, M, TL, HW), lambda n, lb: (n, 0, lb, 0)),
        compiler_params=pltpu.CompilerParams(
            dimension_semantics=("parallel", "parallel"),
        ),
    )(x4, bits)

    return out.reshape(N, M, L, H, W)


if __name__ == "__main__":
    # Small shapes consistent with the 5-D (N, M, L, H, W) input the module expects.
    N, M, L, H, W = 2, 4, 3, 16, 16
    p = 0.25

    root = jax.random.PRNGKey(0)
    xkey, dkey = jax.random.split(root)
    x = jax.random.normal(xkey, (N, M, L, H, W), dtype=jnp.float32)

    y = jax.block_until_ready(bases_drop(x, p=p, key=dkey, training=True))

    # Reference: recompute the exact same mask from the same key.
    HW = H * W
    keep_prob = 1.0 - p
    scale = 1.0 / keep_prob
    threshold = min(int(round(keep_prob * 2.0**32)), 2**32 - 1)
    bits_ref = jax.random.bits(dkey, (N, L, HW), dtype=jnp.uint32)
    mask_scaled = jnp.where(
        bits_ref < jnp.uint32(threshold), jnp.float32(scale), jnp.float32(0.0)
    ).reshape(N, 1, L, H, W)
    expected = x * mask_scaled  # broadcast over M, exactly like the kernel

    assert y.shape == x.shape and y.dtype == x.dtype
    assert bool(jnp.allclose(y, expected, rtol=1e-6, atol=1e-6)), (
        "kernel output does not match reference dropout"
    )
    # Mask must be shared across the M (bases) dimension: since it was built
    # from a (N, 1, L, H, W) broadcast, the reference check above implies it.

    # Eval mode is identity.
    y_eval = jax.block_until_ready(bases_drop(x, p=p, key=dkey, training=False))
    assert bool(jnp.all(y_eval == x))

    print("KERNEL_OK")
</pallas_src>

<mosaic_0001>
module attributes {stable_mosaic.version = 11 : i64} {
  func.func @_bases_drop_kernel(%arg0: i32, %arg1: i32, %arg2: memref<1x4x3x256xf32, #tpu.memory_space<vmem>>, %arg3: memref<1x3x256xi32, #tpu.memory_space<vmem>>, %arg4: memref<1x4x3x256xf32, #tpu.memory_space<vmem>>) attributes {dimension_semantics = [#tpu.dimension_semantics<parallel>, #tpu.dimension_semantics<parallel>], iteration_bounds = array<i64: 2, 1>, scalar_prefetch = 0 : i64, scratch_operands = 0 : i64, tpu.core_type = #tpu.core_type<tc>, window_params = [{transform_indices = @transform_0, window_bounds = array<i64: 1, 4, 3, 256>}, {transform_indices = @transform_1, window_bounds = array<i64: 1, 3, 256>}, {transform_indices = @transform_2, window_bounds = array<i64: 1, 4, 3, 256>}]} {
    %c0 = arith.constant 0 : index
    %c0_0 = arith.constant 0 : index
    %c0_1 = arith.constant 0 : index
    %0 = vector.load %arg3[%c0, %c0_0, %c0_1] : memref<1x3x256xi32, #tpu.memory_space<vmem>>, vector<1x3x256xi32>
    %1 = vector.shape_cast %0 : vector<1x3x256xi32> to vector<3x256xi32>
    %c-1073741824_i32 = arith.constant -1073741824 : i32
    %2 = vector.broadcast %c-1073741824_i32 : i32 to vector<3x256xi32>
    %3 = arith.cmpi ult, %1, %2 : vector<3x256xi32>
    %cst = arith.constant 1.33333337 : f32
    %cst_2 = arith.constant 0.000000e+00 : f32
    %4 = vector.broadcast %cst : f32 to vector<3x256xf32>
    %5 = vector.broadcast %cst_2 : f32 to vector<3x256xf32>
    %6 = arith.select %3, %4, %5 : vector<3x256xi1>, vector<3x256xf32>
    %c0_3 = arith.constant 0 : index
    %c0_4 = arith.constant 0 : index
    %c0_5 = arith.constant 0 : index
    %c0_6 = arith.constant 0 : index
    %7 = vector.load %arg2[%c0_3, %c0_4, %c0_5, %c0_6] : memref<1x4x3x256xf32, #tpu.memory_space<vmem>>, vector<1x4x3x256xf32>
    %8 = vector.shape_cast %7 : vector<1x4x3x256xf32> to vector<4x3x256xf32>
    %9 = vector.shape_cast %6 : vector<3x256xf32> to vector<1x3x256xf32>
    %10 = vector.broadcast %9 : vector<1x3x256xf32> to vector<4x3x256xf32>
    %11 = arith.mulf %8, %10 : vector<4x3x256xf32>
    %c0_7 = arith.constant 0 : index
    %c0_8 = arith.constant 0 : index
    %c0_9 = arith.constant 0 : index
    %c0_10 = arith.constant 0 : index
    %12 = vector.load %arg4[%c0_7, %c0_8, %c0_9, %c0_10] : memref<1x4x3x256xf32, #tpu.memory_space<vmem>>, vector<1x4x3x256xf32>
    %13 = vector.shape_cast %12 : vector<1x4x3x256xf32> to vector<4x3x256xf32>
    %14 = vector.shape_cast %11 : vector<4x3x256xf32> to vector<1x4x3x256xf32>
    tpu.vector_store %arg4[%c0_7, %c0_8, %c0_9, %c0_10], %14 {strides = array<i32>} : memref<1x4x3x256xf32, #tpu.memory_space<vmem>>, vector<1x4x3x256xf32>,
    return
  }
  func.func @transform_0(%arg0: i32, %arg1: i32) -> (i32, i32, i32, i32) {
    %c0_i32 = arith.constant 0 : i32
    %c0_i32_0 = arith.constant 0 : i32
    %c0_i32_1 = arith.constant 0 : i32
    return %arg0, %c0_i32, %arg1, %c0_i32_0 : i32, i32, i32, i32
  }
  func.func @transform_1(%arg0: i32, %arg1: i32) -> (i32, i32, i32) {
    %c0_i32 = arith.constant 0 : i32
    %c0_i32_0 = arith.constant 0 : i32
    return %arg0, %arg1, %c0_i32 : i32, i32, i32
  }
  func.func @transform_2(%arg0: i32, %arg1: i32) -> (i32, i32, i32, i32) {
    %c0_i32 = arith.constant 0 : i32
    %c0_i32_0 = arith.constant 0 : i32
    %c0_i32_1 = arith.constant 0 : i32
    return %arg0, %c0_i32, %arg1, %c0_i32_0 : i32, i32, i32, i32
  }
}

</mosaic_0001>

<llo_original>
// kernel: tpu_custom_call.1
$region0: #{tpu_custom_call.1}
  #allocation0 [shape = 'u32[]', space=smem, size = 0x4, offset = 0x4, fixed_abs, tag = 'smem constant byte address 0x4 - core index']
  #allocation1 [shape = 'u32[72,128]{1,0:T(1,128)}', space=vmem, size = 0x9000, scoped, tag = 'internal scratch']
  %s0 = inlined_call_operand.vmem [shape: f32[2,4,3,256], index: 0, kind: input, shape index: {}]
  %s1 = inlined_call_operand.vmem [shape: u32[2,3,256], index: 1, kind: input, shape index: {}]
  %s2 = inlined_call_operand.vmem [shape: f32[2,4,3,256], index: 2, kind: output, shape index: {}]
  %s3 = sld [smem:[#allocation0]]
  $region41: #{tpu_custom_call.1} parent=0
    _
  %s5 = ssub.s32 1, %s3
  %s6 = scalar_select 0, %s5, %s3
  loop: start=0, step=1, limit=4
  $region2: #{tpu_custom_call.1} parent=0 // loop_pre_header
    _
  $region3: #{tpu_custom_call.1} parent=0 // loop_header
    %s8 = sphi 0, %s12
    %p9 = scmp.ge.s32.totalorder %s8, 4
    %s15 = sphi 0, %s27
    %s16 = sphi 0, %s23
    %s17 = sphi 0, %s15
    %s18 = sphi 0, %s16
    %s19 = sphi 0, %s17
    %s20 = sphi 0, %s18
    %s32 = sphi 0, %s34
    %s35 = sphi 0, %s32
    %s36 = sphi 0, %s35
    %s52 = sphi 0, %s36
    %s60 = sphi 0, %s62
    %s63 = sphi 0, %s60
    %s64 = sphi 0, %s63
    %s80 = sphi 0, %s64
    %s88 = sphi 0, %s90
    %s91 = sphi 0, %s88
    %s92 = sphi 0, %s91
    %s108 = sphi 0, %s92
  $region4: #{tpu_custom_call.1} parent=0 // loop_header_branch
    %11 = sbr.rel (%p9) target = $region8
  $region5: #{tpu_custom_call.1} parent=0 // loop_body
    %s13 = ssub.s32 %s8, 1
    %s14 = ssub.s32 %s8, 2
    %s21 = sadd.s32 1, %s16
    %p22 = scmp.ge.s32.totalorder %s21, 1
    %s23 = scalar_select %p22, 0, %s21
    %s24 = sadd.s32 1, %s15
    %s25 = scalar_select %p22, %s24, %s15
    %p26 = scmp.ge.s32.totalorder %s25, 2
    %s27 = scalar_select %p26, 0, %s25
    %s28 = ssub.s32 %s15, %s27
    %s29 = ssub.s32 %s16, %s23
    %s30 = sor.u32 %s28, %s29
    %p31 = scmp.eq.s32.totalorder %s30, 0
    %s33 = sadd.s32 %s32, 1
    %s34 = scalar_select %p31, %s32, %s33
    %p37 = pneg %p31
    %p38 = scmp.eq.s32.totalorder %s8, 1
    %p39 = por %p37, %p38
    %p40 = scmp.ne.s32.totalorder %s32, %s35
    %p41 = scmp.eq.s32.totalorder %s8, 0
    %p42 = por %p40, %p41
    %p43 = scmp.ne.s32.totalorder %s32, %s35
    %p44 = scmp.eq.s32.totalorder %s13, 1
    %p45 = por %p43, %p44
    %p46 = scmp.ne.s32.totalorder %s35, %s36
    %p47 = scmp.eq.s32.totalorder %s13, 0
    %p48 = por %p46, %p47
    %p49 = scmp.ne.s32.totalorder %s35, %s36
    %p50 = scmp.eq.s32.totalorder %s14, 1
    %p51 = por %p49, %p50
    %p53 = scmp.ne.s32.totalorder %s36, %s52
    %p54 = scmp.eq.s32.totalorder %s14, 0
    %p55 = por %p53, %p54
    %s56 = ssub.s32 %s15, %s27
    %s57 = ssub.s32 %s16, %s23
    %s58 = sor.u32 %s56, %s57
    %p59 = scmp.eq.s32.totalorder %s58, 0
    %s61 = sadd.s32 %s60, 1
    %s62 = scalar_select %p59, %s60, %s61
    %p65 = pneg %p59
    %p66 = scmp.eq.s32.totalorder %s8, 1
    %p67 = por %p65, %p66
    %p68 = scmp.ne.s32.totalorder %s60, %s63
    %p69 = scmp.eq.s32.totalorder %s8, 0
    %p70 = por %p68, %p69
    %p71 = scmp.ne.s32.totalorder %s60, %s63
    %p72 = scmp.eq.s32.totalorder %s13, 1
    %p73 = por %p71, %p72
    %p74 = scmp.ne.s32.totalorder %s63, %s64
    %p75 = scmp.eq.s32.totalorder %s13, 0
    %p76 = por %p74, %p75
    %p77 = scmp.ne.s32.totalorder %s63, %s64
    %p78 = scmp.eq.s32.totalorder %s14, 1
    %p79 = por %p77, %p78
    %p81 = scmp.ne.s32.totalorder %s64, %s80
    %p82 = scmp.eq.s32.totalorder %s14, 0
    %p83 = por %p81, %p82
    %s84 = ssub.s32 %s15, %s27
    %s85 = ssub.s32 %s16, %s23
    %s86 = sor.u32 %s84, %s85
    %p87 = scmp.eq.s32.totalorder %s86, 0
    %s89 = sadd.s32 %s88, 1
    %s90 = scalar_select %p87, %s88, %s89
    %p93 = pneg %p87
    %p94 = scmp.eq.s32.totalorder %s8, 1
    %p95 = por %p93, %p94
    %p96 = scmp.ne.s32.totalorder %s88, %s91
    %p97 = scmp.eq.s32.totalorder %s8, 0
    %p98 = por %p96, %p97
    %p99 = scmp.ne.s32.totalorder %s88, %s91
    %p100 = scmp.eq.s32.totalorder %s13, 1
    %p101 = por %p99, %p100
    %p102 = scmp.ne.s32.totalorder %s91, %s92
    %p103 = scmp.eq.s32.totalorder %s13, 0
    %p104 = por %p102, %p103
    %p105 = scmp.ne.s32.totalorder %s91, %s92
    %p106 = scmp.eq.s32.totalorder %s14, 1
    %p107 = por %p105, %p106
    %p109 = scmp.ne.s32.totalorder %s92, %s108
    %p110 = scmp.eq.s32.totalorder %s14, 0
    %p111 = por %p109, %p110
    %p112 = scmp.le.s32.totalorder 1, %s8
    %p113 = scmp.lt.s32.totalorder %s8, 3
    %p114 = pnand %p112, %p113
    %p115 = pneg %p114
    // Predicated region
    $region9: #{tpu_custom_call.1} parent=5 // pred_check
      _
    $region10: #{tpu_custom_call.1} parent=5 // pred_check_branch
      %117 = sbr.rel (%p114) target = $region12
    $region11: #{tpu_custom_call.1} parent=5 // pred_region
      %s118 = ssub.s32 %s8, 1
    $region12: #{tpu_custom_call.1} parent=5 // pred_fallthru
      _
    %p119 = scmp.lt.s32.totalorder %s8, 2
    // Predicated region
    $region13: #{tpu_custom_call.1} parent=5 // pred_check
      %p120 = pneg %p119
    $region14: #{tpu_custom_call.1} parent=5 // pred_check_branch
      %122 = sbr.rel (%p120) target = $region16
    $region15: #{tpu_custom_call.1} parent=5 // pred_region
      // Predicated region
      $region17: #{tpu_custom_call.1} parent=15 // pred_check
        %p123 = pneg %p42
      $region18: #{tpu_custom_call.1} parent=15 // pred_check_branch
        %125 = sbr.rel (%p123) target = $region20
      $region19: #{tpu_custom_call.1} parent=15 // pred_region
        %p126 = scmp.lt.s32.totalorder %s15, 1
        %s127 = scalar_select %p126, %s15, 1
        %p128 = scmp.lt.s32.totalorder %s16, 0
        %s129 = scalar_select %p128, %s16, 0
        %s130 = smul.addr %s129, 2
        %s131 = smul.addr %s127, 8
        %s132 = sadd.s32 %s130, %s131
        %s133 = smul.addr %s132, 4
        %s134 = scalar_lea.vmem %s0, %s133
      $region20: #{tpu_custom_call.1} parent=15 // pred_fallthru
        _
      // Predicated region
      $region21: #{tpu_custom_call.1} parent=15 // pred_check
        %p135 = pneg %p70
      $region22: #{tpu_custom_call.1} parent=15 // pred_check_branch
        %137 = sbr.rel (%p135) target = $region24
      $region23: #{tpu_custom_call.1} parent=15 // pred_region
        %p138 = scmp.lt.s32.totalorder %s15, 1
        %s139 = scalar_select %p138, %s15, 1
        %p140 = scmp.lt.s32.totalorder %s16, 0
        %s141 = scalar_select %p140, %s16, 0
        %s142 = smul.addr %s141, 2
        %s143 = smul.addr %s139, 2
        %s144 = sadd.s32 %s142, %s143
        %s145 = smul.addr %s144, 4
        %s146 = scalar_lea.vmem %s1, %s145
      $region24: #{tpu_custom_call.1} parent=15 // pred_fallthru
        _
    $region16: #{tpu_custom_call.1} parent=5 // pred_fallthru
      _
    %p147 = scmp.le.s32.totalorder 1, %s8
    %p148 = scmp.lt.s32.totalorder %s8, 3
    %p149 = pnand %p147, %p148
    %p150 = pneg %p149
    // Predicated region
    $region25: #{tpu_custom_call.1} parent=5 // pred_check
      _
    $region26: #{tpu_custom_call.1} parent=5 // pred_check_branch
      %152 = sbr.rel (%p149) target = $region28
    $region27: #{tpu_custom_call.1} parent=5 // pred_region
      %s153 = ssub.s32 %s8, 1
      %p154 = scmp.lt.s32.totalorder %s17, 1
      %s155 = scalar_select %p154, %s17, 1
      %p156 = scmp.lt.s32.totalorder %s18, 0
      %s157 = scalar_select %p156, %s18, 0
      %s158 = smul.addr %s157, 2
      %s159 = smul.addr %s155, 8
      %s160 = sadd.s32 %s158, %s159
      %s161 = smul.addr %s160, 4
      %s162 = scalar_lea.vmem %s0, %s161
      %p163 = pneg %p48
      %p164 = pneg %p45
      %p165 = scmp.lt.s32.totalorder %s17, 1
      %s166 = scalar_select %p165, %s17, 1
      %p167 = scmp.lt.s32.totalorder %s18, 0
      %s168 = scalar_select %p167, %s18, 0
      %s169 = smul.addr %s168, 2
      %s170 = smul.addr %s166, 2
      %s171 = sadd.s32 %s169, %s170
      %s172 = smul.addr %s171, 4
      %s173 = scalar_lea.vmem %s1, %s172
      %p174 = pneg %p76
      %p175 = pneg %p73
      %p176 = pneg %p104
      %p177 = pneg %p101
      %p178 = scmp.lt.s32.totalorder %s17, 1
      %s179 = scalar_select %p178, %s17, 1
      %p180 = scmp.lt.s32.totalorder %s18, 0
      %s181 = scalar_select %p180, %s18, 0
      %s182 = smul.addr %s181, 2
      %s183 = smul.addr %s179, 8
      %s184 = sadd.s32 %s182, %s183
      %s185 = smul.addr %s184, 4
      %s186 = scalar_lea.vmem %s2, %s185
      %p187 = scmp.lt.s32.totalorder %s17, 1
      %s188 = scalar_select %p187, %s17, 1
      %p189 = scmp.lt.s32.totalorder %s18, 0
      %s190 = scalar_select %p189, %s18, 0
      %s191 = smul.addr %s190, 2
      %s192 = smul.addr %s188, 8
      %s193 = sadd.s32 %s191, %s192
      %s194 = smul.addr %s193, 4
      %s195 = scalar_lea.vmem %s0, %s194
      %p196 = scmp.lt.s32.totalorder %s17, 1
      %s197 = scalar_select %p196, %s17, 1
      %p198 = scmp.lt.s32.totalorder %s18, 0
      %s199 = scalar_select %p198, %s18, 0
      %s200 = smul.addr %s199, 2
      %s201 = smul.addr %s197, 2
      %s202 = sadd.s32 %s200, %s201
      %s203 = smul.addr %s202, 4
      %s204 = scalar_lea.vmem %s1, %s203
      %p205 = scmp.lt.s32.totalorder %s17, 1
      %s206 = scalar_select %p205, %s17, 1
      %p207 = scmp.lt.s32.totalorder %s18, 0
      %s208 = scalar_select %p207, %s18, 0
      %s209 = smul.addr %s208, 2
      %s210 = smul.addr %s206, 8
      %s211 = sadd.s32 %s209, %s210
      %s212 = smul.addr %s211, 4
      %s213 = scalar_lea.vmem %s2, %s212
      %v214 = vld [vmem:[%s204] sm:$0x77]
      %v215 = vadd.s32 %v214, 2147483648
      %vm217 = vcmp.lt.s32.totalorder %v215, 1073741824
      %v218 = vsel %vm217, 1.3333334, 0.0
      %v219 = vld [vmem:[%s195] sm:$0x77]
      %v220 = vld [vmem:[%s195 + $0x8] sm:$0x77]
      %v221 = vld [vmem:[%s195 + $0x10] sm:$0x77]
      %v222 = vld [vmem:[%s195 + $0x18] sm:$0x77]
      %v223 = vmul.f32 %v219, %v218
      %v224 = vmul.f32 %v220, %v218
      %v225 = vmul.f32 %v221, %v218
      %v226 = vmul.f32 %v222, %v218
      %227 = vst [vmem:[%s213] sm:$0x77] %v223
      %228 = vst [vmem:[%s213 + $0x8] sm:$0x77] %v224
      %229 = vst [vmem:[%s213 + $0x10] sm:$0x77] %v225
      %230 = vst [vmem:[%s213 + $0x18] sm:$0x77] %v226
      %p231 = scmp.lt.s32.totalorder %s17, 1
      %s232 = scalar_select %p231, %s17, 1
      %p233 = scmp.lt.s32.totalorder %s18, 0
      %s234 = scalar_select %p233, %s18, 0
      %s235 = smul.addr %s234, 2
      %s236 = smul.addr %s232, 8
      %s237 = sadd.s32 %s235, %s236
      %s238 = smul.addr %s237, 4
      %s239 = scalar_lea.vmem %s2, %s238
      // Predicated region
      $region29: #{tpu_custom_call.1} parent=27 // pred_check
        %p240 = pneg %p101
      $region30: #{tpu_custom_call.1} parent=27 // pred_check_branch
        %242 = sbr.rel (%p240) target = $region32
      $region31: #{tpu_custom_call.1} parent=27 // pred_region
        _
      $region32: #{tpu_custom_call.1} parent=27 // pred_fallthru
        _
    $region28: #{tpu_custom_call.1} parent=5 // pred_fallthru
      _
    %p243 = scmp.le.s32.totalorder 2, %s8
    // Predicated region
    $region33: #{tpu_custom_call.1} parent=5 // pred_check
      %p244 = pneg %p243
    $region34: #{tpu_custom_call.1} parent=5 // pred_check_branch
      %246 = sbr.rel (%p244) target = $region36
    $region35: #{tpu_custom_call.1} parent=5 // pred_region
      %s247 = ssub.s32 %s8, 2
      // Predicated region
      $region37: #{tpu_custom_call.1} parent=35 // pred_check
        %p248 = pneg %p107
      $region38: #{tpu_custom_call.1} parent=35 // pred_check_branch
        %250 = sbr.rel (%p248) target = $region40
      $region39: #{tpu_custom_call.1} parent=35 // pred_region
        %p251 = scmp.lt.s32.totalorder %s19, 1
        %s252 = scalar_select %p251, %s19, 1
        %p253 = scmp.lt.s32.totalorder %s20, 0
        %s254 = scalar_select %p253, %s20, 0
        %s255 = smul.addr %s254, 2
        %s256 = smul.addr %s252, 8
        %s257 = sadd.s32 %s255, %s256
        %s258 = smul.addr %s257, 4
        %s259 = scalar_lea.vmem %s2, %s258
      $region40: #{tpu_custom_call.1} parent=35 // pred_fallthru
        _
    $region36: #{tpu_custom_call.1} parent=5 // pred_fallthru
      _
  $region6: #{tpu_custom_call.1} parent=0 // loop_footer
    %s12 = sadd.s32 1, %s8
  $region7: #{tpu_custom_call.1} parent=0 // loop_footer_branch
    %7 = sbr.rel target = $region3
  $region8: #{tpu_custom_call.1} parent=0 // loop_exit
    _

</llo_original>
